<compile_context>
chip_gen: v6e
topology: v6e:2x2x1
jax: 0.10.0
libtpu: 0.0.40
codegen_flags: <defaults>
</compile_context>

<pallas_src>
import jax
import jax.numpy as jnp
from jax.experimental import pallas as pl
from jax.experimental.pallas import tpu as pltpu

N_ATMOS = 4
N_GROUND = 13
N_OUT = N_ATMOS + N_GROUND  # 17

_M_TILE = 256  # rows per grid step when batched (fills the v6e/v7x MXU; fine on v5e)


def _classifier_kernel(x_ref, w_ref, b_ref, o_ref):
    # x_ref: (TM, in_f) input dtype   w_ref: (17, in_f) bf16
    # b_ref: (1, 17)    f32           o_ref: (TM, 17)   f32
    x = x_ref[...].astype(w_ref.dtype)   # cast to bf16 in-kernel (MXU-native)
    w = w_ref[...]
    b = b_ref[...]

    # Fused linear for both heads: contract the lane (feature) axis of both
    # operands -> (TM, 17), f32 accumulation on the MXU.
    y = jax.lax.dot_general(
        x, w,
        dimension_numbers=(((1,), (1,)), ((), ())),
        preferred_element_type=jnp.float32,
    ) + b

    # Masked softmax over the first N_ATMOS lanes only (in-register, VPU+EUP).
    lane = jax.lax.broadcasted_iota(jnp.int32, y.shape, dimension=1)
    is_atmos = lane < N_ATMOS

    atmos_logits = jnp.where(is_atmos, y, -jnp.inf)
    m = jnp.max(atmos_logits, axis=-1, keepdims=True)        # (TM, 1), always finite
    e = jnp.where(is_atmos, jnp.exp(atmos_logits - m), 0.0)  # (TM, 17)
    denom = jnp.sum(e, axis=-1, keepdims=True)                # (TM, 1)
    atmos = e * pl.reciprocal(denom, approx=True)             # EUP divide

    o_ref[...] = jnp.where(is_atmos, atmos, y).astype(o_ref.dtype)


def fuse_classifier_params(wa, ba, wg, bg, compute_dtype=jnp.bfloat16):
    """Fuse the two heads ONCE (call at init, not per forward).

    Returns:
      w_fused: (17, in_f) in `compute_dtype` (bf16 by default; MXU-native).
      b_fused: (1, 17) f32 (kept in f32 for bias precision).
    """
    w_fused = jnp.concatenate([wa, wg], axis=0).astype(compute_dtype)          # (17, in_f)
    b_fused = jnp.concatenate([ba, bg], axis=0).reshape(1, N_OUT).astype(jnp.float32)
    return w_fused, b_fused


def _classifier_pallas(x2d, w_fused, b_fused, tm):
    bp, in_f = x2d.shape
    return pl.pallas_call(
        _classifier_kernel,
        out_shape=jax.ShapeDtypeStruct((bp, N_OUT), jnp.float32),
        grid=(bp // tm,),
        in_specs=[
            pl.BlockSpec((tm, in_f), lambda i: (i, 0)),        # x rows, tiled over M
            pl.BlockSpec((N_OUT, in_f), lambda i: (0, 0)),     # weight resident across grid
            pl.BlockSpec((1, N_OUT), lambda i: (0, 0)),        # bias resident across grid
        ],
        out_specs=pl.BlockSpec((tm, N_OUT), lambda i: (i, 0)),
        compiler_params=pltpu.CompilerParams(
            dimension_semantics=("parallel",)),
    )(x2d, w_fused, b_fused)


def classifier_forward_batched(x2d, w_fused, b_fused):
    """x2d: (B, in_f) already-flattened samples -> (B, 17)."""
    b, in_f = x2d.shape
    if b <= _M_TILE:
        tm = b                                 # single grid step, full-extent M block
    else:
        tm = _M_TILE
        bp = ((b + tm - 1) // tm) * tm
        if bp != b:
            x2d = jnp.pad(x2d, ((0, bp - b), (0, 0)))
    out = _classifier_pallas(x2d, w_fused, b_fused, tm)
    return out[:b]


def classifier_forward(x, w_fused, b_fused):
    """Module-equivalent forward: flatten everything, return (17,)."""
    x_flat = x.reshape(1, -1)
    return classifier_forward_batched(x_flat, w_fused, b_fused)[0]


if __name__ == "__main__":
    key = jax.random.PRNGKey(0)
    k_x, k_wa, k_ba, k_wg, k_bg, k_xb = jax.random.split(key, 6)

    # Small input consistent with the module: forward flattens everything,
    # so in_f = prod(x.shape).
    x = jax.random.normal(k_x, (2, 4, 16, 16), dtype=jnp.float32)
    in_f = x.size  # 2048

    # Deterministic parameter init (PyTorch-Linear-style uniform bound).
    bound = 1.0 / jnp.sqrt(jnp.float32(in_f))
    wa = jax.random.uniform(k_wa, (N_ATMOS, in_f), jnp.float32, -bound, bound)
    ba = jax.random.uniform(k_ba, (N_ATMOS,), jnp.float32, -bound, bound)
    wg = jax.random.uniform(k_wg, (N_GROUND, in_f), jnp.float32, -bound, bound)
    bg = jax.random.uniform(k_bg, (N_GROUND,), jnp.float32, -bound, bound)

    # Fuse once at init — this cost is NOT paid per forward call.
    w_fused, b_fused = fuse_classifier_params(wa, ba, wg, bg)
    w_fused, b_fused = jax.block_until_ready((w_fused, b_fused))

    # --- module-equivalent single-sample forward ---
    out = classifier_forward(x, w_fused, b_fused)
    out = jax.block_until_ready(out)

    # Pure-JAX reference (inputs rounded to bf16 like the MXU operands,
    # f32 accumulation + f32 bias, matching the kernel's numerics).
    def ref_fn(x_flat):
        xb = x_flat.astype(jnp.bfloat16).astype(jnp.float32)
        wab = wa.astype(jnp.bfloat16).astype(jnp.float32)
        wgb = wg.astype(jnp.bfloat16).astype(jnp.float32)
        atmos = jax.nn.softmax(wab @ xb + ba)
        ground = wgb @ xb + bg
        return jnp.concatenate([atmos, ground])

    ref = ref_fn(x.reshape(-1))
    assert out.shape == (N_OUT,)
    assert jnp.allclose(out, ref, atol=5e-3, rtol=5e-3), (out, ref)

    # --- batched path: amortizes weight DMA / launch cost over rows ---
    xb = jax.random.normal(k_xb, (4, in_f), dtype=jnp.float32)
    out_b = jax.block_until_ready(classifier_forward_batched(xb, w_fused, b_fused))
    ref_b = jax.vmap(ref_fn)(xb)
    assert out_b.shape == (4, N_OUT)
    assert jnp.allclose(out_b, ref_b, atol=5e-3, rtol=5e-3), (out_b, ref_b)

    print("KERNEL_OK")
</pallas_src>

<mosaic_0001>
module attributes {stable_mosaic.version = 11 : i64} {
  func.func @_classifier_kernel(%arg0: i32, %arg1: memref<1x2048xf32, #tpu.memory_space<vmem>>, %arg2: memref<17x2048xbf16, #tpu.memory_space<vmem>>, %arg3: memref<1x17xf32, #tpu.memory_space<vmem>>, %arg4: memref<1x17xf32, #tpu.memory_space<vmem>>) attributes {dimension_semantics = [#tpu.dimension_semantics<parallel>], iteration_bounds = array<i64: 1>, scalar_prefetch = 0 : i64, scratch_operands = 0 : i64, tpu.core_type = #tpu.core_type<tc>, window_params = [{transform_indices = @transform_0, window_bounds = array<i64: 1, 2048>}, {pipeline_mode = #tpu.pipeline_mode<synchronous>, transform_indices = @transform_1, window_bounds = array<i64: 17, 2048>}, {pipeline_mode = #tpu.pipeline_mode<synchronous>, transform_indices = @transform_2, window_bounds = array<i64: 1, 17>}, {transform_indices = @transform_3, window_bounds = array<i64: 1, 17>}]} {
    %c0 = arith.constant 0 : index
    %c0_0 = arith.constant 0 : index
    %0 = vector.load %arg1[%c0, %c0_0] : memref<1x2048xf32, #tpu.memory_space<vmem>>, vector<1x2048xf32>
    %1 = arith.truncf %0 : vector<1x2048xf32> to vector<1x2048xbf16>
    %c0_1 = arith.constant 0 : index
    %c0_2 = arith.constant 0 : index
    %2 = vector.load %arg2[%c0_1, %c0_2] : memref<17x2048xbf16, #tpu.memory_space<vmem>>, vector<17x2048xbf16>
    %c0_3 = arith.constant 0 : index
    %c0_4 = arith.constant 0 : index
    %3 = vector.load %arg3[%c0_3, %c0_4] : memref<1x17xf32, #tpu.memory_space<vmem>>, vector<1x17xf32>
    %cst = arith.constant dense<0.000000e+00> : vector<1x17xf32>
    %4 = tpu.matmul %1, %2, %cst {dimension_numbers = #tpu.dot_dimension_numbers<[1], [1], [0], [0], [0, 0, 1, 0], [], []>} : vector<1x2048xbf16>, vector<17x2048xbf16>, vector<1x17xf32> -> vector<1x17xf32>
    %5 = arith.addf %4, %3 : vector<1x17xf32>
    %6 = tpu.iota {dimensions = array<i32: 1>} : vector<1x17xi32>
    %c4_i32 = arith.constant 4 : i32
    %7 = vector.broadcast %c4_i32 : i32 to vector<1x17xi32>
    %8 = arith.cmpi slt, %6, %7 : vector<1x17xi32>
    %cst_5 = arith.constant 0xFF800000 : f32
    %9 = vector.broadcast %cst_5 : f32 to vector<1x17xf32>
    %10 = arith.select %8, %5, %9 : vector<1x17xi1>, vector<1x17xf32>
    %cst_6 = arith.constant dense<0xFF800000> : vector<1xf32>
    %11 = vector.multi_reduction <maximumf>, %10, %cst_6 [1] : vector<1x17xf32> to vector<1xf32>
    %12 = vector.shape_cast %11 : vector<1xf32> to vector<1x1xf32>
    %13 = vector.broadcast %12 : vector<1x1xf32> to vector<1x17xf32>
    %14 = arith.subf %10, %13 : vector<1x17xf32>
    %15 = math.exp %14 : vector<1x17xf32>
    %cst_7 = arith.constant 0.000000e+00 : f32
    %16 = vector.broadcast %cst_7 : f32 to vector<1x17xf32>
    %17 = arith.select %8, %15, %16 : vector<1x17xi1>, vector<1x17xf32>
    %cst_8 = arith.constant dense<0.000000e+00> : vector<1xf32>
    %18 = vector.multi_reduction <add>, %17, %cst_8 [1] : vector<1x17xf32> to vector<1xf32>
    %19 = vector.shape_cast %18 : vector<1xf32> to vector<1x1xf32>
    %20 = tpu.reciprocal %19 {approx = true} : vector<1x1xf32> -> vector<1x1xf32>
    %21 = vector.broadcast %20 : vector<1x1xf32> to vector<1x17xf32>
    %22 = arith.mulf %17, %21 : vector<1x17xf32>
    %23 = arith.select %8, %22, %5 : vector<1x17xi1>, vector<1x17xf32>
    %c0_9 = arith.constant 0 : index
    %c0_10 = arith.constant 0 : index
    %24 = vector.load %arg4[%c0_9, %c0_10] : memref<1x17xf32, #tpu.memory_space<vmem>>, vector<1x17xf32>
    tpu.vector_store %arg4[%c0_9, %c0_10], %23 {strides = array<i32>} : memref<1x17xf32, #tpu.memory_space<vmem>>, vector<1x17xf32>,
    return
  }
  func.func @transform_0(%arg0: i32) -> (i32, i32) {
    %c0_i32 = arith.constant 0 : i32
    %c0_i32_0 = arith.constant 0 : i32
    return %arg0, %c0_i32 : i32, i32
  }
  func.func @transform_1(%arg0: i32) -> (i32, i32) {
    %c0_i32 = arith.constant 0 : i32
    %c0_i32_0 = arith.constant 0 : i32
    %c0_i32_1 = arith.constant 0 : i32
    return %c0_i32, %c0_i32_0 : i32, i32
  }
  func.func @transform_2(%arg0: i32) -> (i32, i32) {
    %c0_i32 = arith.constant 0 : i32
    %c0_i32_0 = arith.constant 0 : i32
    %c0_i32_1 = arith.constant 0 : i32
    return %c0_i32, %c0_i32_0 : i32, i32
  }
  func.func @transform_3(%arg0: i32) -> (i32, i32) {
    %c0_i32 = arith.constant 0 : i32
    %c0_i32_0 = arith.constant 0 : i32
    return %arg0, %c0_i32 : i32, i32
  }
}

</mosaic_0001>

<llo_original>
// kernel: tpu_custom_call.1
$region0: #{tpu_custom_call.1}
  #allocation0 [shape = 'u32[]', space=smem, size = 0x4, offset = 0x4, fixed_abs, tag = 'smem constant byte address 0x4 - core index']
  #allocation1 [shape = 'u32[144,128]{1,0:T(1,128)}', space=vmem, size = 0x12000, scoped, tag = 'internal scratch']
  %s0 = inlined_call_operand.hbm [shape: f32[1,2048], index: 0, kind: input, shape index: {}]
  %s1 = inlined_call_operand.hbm [shape: bf16[17,2048], index: 1, kind: input, shape index: {}]
  %s2 = inlined_call_operand.vmem [shape: f32[1,17], index: 2, kind: input, shape index: {}]
  %s3 = inlined_call_operand.hbm [shape: f32[1,17], index: 3, kind: output, shape index: {}]
  %s4 = sld [smem:[#allocation0]]
  $region30: #{tpu_custom_call.1} parent=0
    _
  %s6 = ssub.s32 1, %s4
  %s7 = scalar_select 0, %s6, %s4
  $region1: #{tpu_custom_call.1} parent=0
    #allocation2 [shape = 'u8[8192]{0}', space=vmem, size = 0x2000, scoped, tag = 'input window, operand 0, single buffered']
    #allocation3 [shape = 's32[1]{0}', space=sflag, size = 0x4, scoped, tag = 'scoped memory for tpu_custom_call.1']
    #allocation4 [shape = 's32[1]{0}', space=sflag, size = 0x4, scoped, tag = 'scoped memory for tpu_custom_call.1']
    #allocation5 [shape = 'u8[98304]{0}', space=vmem, size = 0x18000, scoped, tag = 'input window, operand 1, single buffered']
    #allocation6 [shape = 's32[1]{0}', space=sflag, size = 0x4, scoped, tag = 'scoped memory for tpu_custom_call.1']
    #allocation7 [shape = 'u8[512]{0}', space=vmem, size = 0x400, scoped, tag = 'output window, operand 0, single buffered']
    %8 = vsyncpa [#allocation3], 0
    %9 = vsyncpa [#allocation6], 0
    %10 = vsyncpa [#allocation4], 0
    // Predicated region
    $region2: #{tpu_custom_call.1} parent=1 // pred_check
      _
    $region3: #{tpu_custom_call.1} parent=1 // pred_check_branch
      %12 = sbr.rel (0) target = $region5
    $region4: #{tpu_custom_call.1} parent=1 // pred_region
      %s14 = ssub.s32 256, 256
      %15 = vsyncadd [#allocation3], %s14
      %s17 = sshll.u32 [#allocation2], 4
      %s18 = int_to_ptr.vmem [resolvable:$true] %s17
      %20 = dma.hbm_to_vmem [thread:$0]  %s0, 256, %s18, [#allocation3]
    $region5: #{tpu_custom_call.1} parent=1 // pred_fallthru
      _
    // Predicated region
    $region6: #{tpu_custom_call.1} parent=1 // pred_check
      _
    $region7: #{tpu_custom_call.1} parent=1 // pred_check_branch
      %22 = sbr.rel (0) target = $region9
    $region8: #{tpu_custom_call.1} parent=1 // pred_region
      %s24 = ssub.s32 3072, 3072
      %25 = vsyncadd [#allocation6], %s24
      %s26 = sshll.u32 [#allocation5], 4
      %s27 = int_to_ptr.vmem [resolvable:$true] %s26
      %32 = dma.hbm_to_vmem [thread:$0]  %s1, 3072, %s27, [#allocation6], 1024, 1024, 64
    $region9: #{tpu_custom_call.1} parent=1 // pred_fallthru
      _
    // Predicated region
    $region10: #{tpu_custom_call.1} parent=1 // pred_check
      _
    $region11: #{tpu_custom_call.1} parent=1 // pred_check_branch
      %34 = sbr.rel (0) target = $region13
    $region12: #{tpu_custom_call.1} parent=1 // pred_region
      _
    $region13: #{tpu_custom_call.1} parent=1 // pred_fallthru
      _
    // Predicated region
    $region14: #{tpu_custom_call.1} parent=1 // pred_check
      _
    $region15: #{tpu_custom_call.1} parent=1 // pred_check_branch
      %36 = sbr.rel (0) target = $region17
    $region16: #{tpu_custom_call.1} parent=1 // pred_region
      %37 = dma.done [#allocation3], 256
    $region17: #{tpu_custom_call.1} parent=1 // pred_fallthru
      _
    // Predicated region
    $region18: #{tpu_custom_call.1} parent=1 // pred_check
      _
    $region19: #{tpu_custom_call.1} parent=1 // pred_check_branch
      %39 = sbr.rel (0) target = $region21
    $region20: #{tpu_custom_call.1} parent=1 // pred_region
      %40 = dma.done [#allocation6], 3072
    $region21: #{tpu_custom_call.1} parent=1 // pred_fallthru
      _
    %v42 = vld [vmem:[#allocation2] sm:$0xff]
    %v43 = vld [vmem:[#allocation2 + $0x8] sm:$0xff]
    %v46 = vlaneseq
    %v47 = vshrl.u32 %v46, 7
    %v48 = vsub.s32 0, %v47
    %v49 = vrot.slane %v42, %v48
    %v50 = vlaneseq
    %v51 = vshrl.u32 %v50, 7
    %v52 = vsub.s32 1, %v51
    %v53 = vrot.slane %v42, %v52
    %v54 = vlaneseq
    %v55 = vshrl.u32 %v54, 7
    %v56 = vsub.s32 2, %v55
    %v57 = vrot.slane %v42, %v56
    %v58 = vlaneseq
    %v59 = vshrl.u32 %v58, 7
    %v60 = vsub.s32 3, %v59
    %v61 = vrot.slane %v42, %v60
    %v62 = vlaneseq
    %v63 = vshrl.u32 %v62, 7
    %v64 = vsub.s32 4, %v63
    %v65 = vrot.slane %v42, %v64
    %v66 = vlaneseq
    %v67 = vshrl.u32 %v66, 7
    %v68 = vsub.s32 5, %v67
    %v69 = vrot.slane %v42, %v68
    %v70 = vlaneseq
    %v71 = vshrl.u32 %v70, 7
    %v72 = vsub.s32 6, %v71
    %v73 = vrot.slane %v42, %v72
    %v74 = vlaneseq
    %v75 = vshrl.u32 %v74, 7
    %v76 = vsub.s32 7, %v75
    %v77 = vrot.slane %v42, %v76
    %v78 = vlaneseq
    %v79 = vshrl.u32 %v78, 7
    %v80 = vsub.s32 0, %v79
    %v81 = vrot.slane %v43, %v80
    %v82 = vlaneseq
    %v83 = vshrl.u32 %v82, 7
    %v84 = vsub.s32 1, %v83
    %v85 = vrot.slane %v43, %v84
    %v86 = vlaneseq
    %v87 = vshrl.u32 %v86, 7
    %v88 = vsub.s32 2, %v87
    %v89 = vrot.slane %v43, %v88
    %v90 = vlaneseq
    %v91 = vshrl.u32 %v90, 7
    %v92 = vsub.s32 3, %v91
    %v93 = vrot.slane %v43, %v92
    %v94 = vlaneseq
    %v95 = vshrl.u32 %v94, 7
    %v96 = vsub.s32 4, %v95
    %v97 = vrot.slane %v43, %v96
    %v98 = vlaneseq
    %v99 = vshrl.u32 %v98, 7
    %v100 = vsub.s32 5, %v99
    %v101 = vrot.slane %v43, %v100
    %v102 = vlaneseq
    %v103 = vshrl.u32 %v102, 7
    %v104 = vsub.s32 6, %v103
    %v105 = vrot.slane %v43, %v104
    %v106 = vlaneseq
    %v107 = vshrl.u32 %v106, 7
    %v108 = vsub.s32 7, %v107
    %v109 = vrot.slane %v43, %v108
    %v126 = vpack.c.bf16 %v49, %v49
    %v127 = vpack.c.bf16 %v53, %v53
    %v128 = vpack.c.bf16 %v57, %v57
    %v129 = vpack.c.bf16 %v61, %v61
    %v130 = vpack.c.bf16 %v65, %v65
    %v131 = vpack.c.bf16 %v69, %v69
    %v132 = vpack.c.bf16 %v73, %v73
    %v133 = vpack.c.bf16 %v77, %v77
    %v134 = vpack.c.bf16 %v81, %v81
    %v135 = vpack.c.bf16 %v85, %v85
    %v136 = vpack.c.bf16 %v89, %v89
    %v137 = vpack.c.bf16 %v93, %v93
    %v138 = vpack.c.bf16 %v97, %v97
    %v139 = vpack.c.bf16 %v101, %v101
    %v140 = vpack.c.bf16 %v105, %v105
    %v141 = vpack.c.bf16 %v109, %v109
    %v142 = vld [vmem:[#allocation5] sm:$0xff]
    %v143 = vld [vmem:[#allocation5 + $0x8] sm:$0xff]
    %v144 = vld [vmem:[#allocation5 + $0x10] sm:$0xff]
    %v145 = vld [vmem:[#allocation5 + $0x18] sm:$0xff]
    %v146 = vld [vmem:[#allocation5 + $0x20] sm:$0xff]
    %v147 = vld [vmem:[#allocation5 + $0x28] sm:$0xff]
    %v148 = vld [vmem:[#allocation5 + $0x30] sm:$0xff]
    %v149 = vld [vmem:[#allocation5 + $0x38] sm:$0xff]
    %v150 = vld [vmem:[#allocation5 + $0x40] sm:$0xff]
    %v151 = vld [vmem:[#allocation5 + $0x48] sm:$0xff]
    %v152 = vld [vmem:[#allocation5 + $0x50] sm:$0xff]
    %v153 = vld [vmem:[#allocation5 + $0x58] sm:$0xff]
    %v154 = vld [vmem:[#allocation5 + $0x60] sm:$0xff]
    %v155 = vld [vmem:[#allocation5 + $0x68] sm:$0xff]
    %v156 = vld [vmem:[#allocation5 + $0x70] sm:$0xff]
    %v157 = vld [vmem:[#allocation5 + $0x78] sm:$0xff]
    %v158 = vld [vmem:[#allocation5 + $0x80] sm:$0x11]
    %v159 = vld [vmem:[#allocation5 + $0x88] sm:$0x11]
    %v160 = vld [vmem:[#allocation5 + $0x90] sm:$0x11]
    %v161 = vld [vmem:[#allocation5 + $0x98] sm:$0x11]
    %v162 = vld [vmem:[#allocation5 + $0xa0] sm:$0x11]
    %v163 = vld [vmem:[#allocation5 + $0xa8] sm:$0x11]
    %v164 = vld [vmem:[#allocation5 + $0xb0] sm:$0x11]
    %v165 = vld [vmem:[#allocation5 + $0xb8] sm:$0x11]
    %v166 = vld [vmem:[%s2] sm:$0x1]
    %v191 = vunpack.c.l.b16 %v142
    %v192 = vunpack.c.h.b16 %v142
    %v193 = vunpack.c.l.b16 %v143
    %v194 = vunpack.c.h.b16 %v143
    %v195 = vunpack.c.l.b16 %v144
    %v196 = vunpack.c.h.b16 %v144
    %v197 = vunpack.c.l.b16 %v145
    %v198 = vunpack.c.h.b16 %v145
    %v199 = vunpack.c.l.b16 %v146
    %v200 = vunpack.c.h.b16 %v146
    %v201 = vunpack.c.l.b16 %v147
    %v202 = vunpack.c.h.b16 %v147
    %v203 = vunpack.c.l.b16 %v148
    %v204 = vunpack.c.h.b16 %v148
    %v205 = vunpack.c.l.b16 %v149
    %v206 = vunpack.c.h.b16 %v149
    %v207 = vunpack.c.l.b16 %v150
    %v208 = vunpack.c.h.b16 %v150
    %v209 = vunpack.c.l.b16 %v151
    %v210 = vunpack.c.h.b16 %v151
    %v211 = vunpack.c.l.b16 %v152
    %v212 = vunpack.c.h.b16 %v152
    %v213 = vunpack.c.l.b16 %v153
    %v214 = vunpack.c.h.b16 %v153
    %v215 = vunpack.c.l.b16 %v154
    %v216 = vunpack.c.h.b16 %v154
    %v217 = vunpack.c.l.b16 %v155
    %v218 = vunpack.c.h.b16 %v155
    %v219 = vunpack.c.l.b16 %v156
    %v220 = vunpack.c.h.b16 %v156
    %v221 = vunpack.c.l.b16 %v157
    %v222 = vunpack.c.h.b16 %v157
    %v223 = vunpack.c.l.b16 %v158
    %v224 = vunpack.c.h.b16 %v158
    %v225 = vunpack.c.l.b16 %v159
    %v226 = vunpack.c.h.b16 %v159
    %v227 = vunpack.c.l.b16 %v160
    %v228 = vunpack.c.h.b16 %v160
    %v229 = vunpack.c.l.b16 %v161
    %v230 = vunpack.c.h.b16 %v161
    %v231 = vunpack.c.l.b16 %v162
    %v232 = vunpack.c.h.b16 %v162
    %v233 = vunpack.c.l.b16 %v163
    %v234 = vunpack.c.h.b16 %v163
    %v235 = vunpack.c.l.b16 %v164
    %v236 = vunpack.c.h.b16 %v164
    %v237 = vunpack.c.l.b16 %v165
    %v238 = vunpack.c.h.b16 %v165
    %v239 = vpack.c.b16 %v207, %v191
    %v240 = vpack.c.b16 %v208, %v192
    %v241 = vpack.c.b16 %v209, %v193
    %v242 = vpack.c.b16 %v210, %v194
    %v243 = vpack.c.b16 %v211, %v195
    %v244 = vpack.c.b16 %v212, %v196
    %v245 = vpack.c.b16 %v213, %v197
    %v246 = vpack.c.b16 %v214, %v198
    %v247 = vpack.c.b16 %v215, %v199
    %v248 = vpack.c.b16 %v216, %v200
    %v249 = vpack.c.b16 %v217, %v201
    %v250 = vpack.c.b16 %v218, %v202
    %v251 = vpack.c.b16 %v219, %v203
    %v252 = vpack.c.b16 %v220, %v204
    %v253 = vpack.c.b16 %v221, %v205
    %v254 = vpack.c.b16 %v222, %v206
    %v255 = vpack.c.b16 %v223, %v223
    %v256 = vpack.c.b16 %v224, %v224
    %v257 = vpack.c.b16 %v225, %v225
    %v258 = vpack.c.b16 %v226, %v226
    %v259 = vpack.c.b16 %v227, %v227
    %v260 = vpack.c.b16 %v228, %v228
    %v261 = vpack.c.b16 %v229, %v229
    %v262 = vpack.c.b16 %v230, %v230
    %v263 = vpack.c.b16 %v231, %v231
    %v264 = vpack.c.b16 %v232, %v232
    %v265 = vpack.c.b16 %v233, %v233
    %v266 = vpack.c.b16 %v234, %v234
    %v267 = vpack.c.b16 %v235, %v235
    %v268 = vpack.c.b16 %v236, %v236
    %v269 = vpack.c.b16 %v237, %v237
    %v270 = vpack.c.b16 %v238, %v238
    %303 = vmatprep.subr.bf16.mxu0 0
    %304 = vmatpush1.bf16.xpose.msra.mxu0 0
    %305 = vmatprep.subr.bf16.mxu0 0
    %306 = vmatpush1.bf16.xpose.msra.mxu0 0
    %307 = vmatprep.subr.bf16.mxu0 0
    %308 = vmatpush1.bf16.xpose.msra.mxu0 0
    %309 = vmatprep.subr.bf16.mxu0 0
    %310 = vmatpush1.bf16.xpose.msra.mxu0 0
    %311 = vmatprep.subr.bf16.mxu0 0
    %312 = vmatpush1.bf16.xpose.msra.mxu0 0
    %313 = vmatprep.subr.bf16.mxu0 0
    %314 = vmatpush1.bf16.xpose.msra.mxu0 0
    %315 = vmatprep.subr.bf16.mxu0 %v256
    %316 = vmatpush1.bf16.xpose.msra.mxu0 %v255
    %317 = vmatprep.subr.bf16.mxu0 %v240
    %318 = vmatpush1.bf16.xpose.msra.mxu0 %v239
    %319 = vmatprep.subr.bf16.mxu0 0
    %320 = vmatpush2.bf16.xpose.msra.mxu0 0
    %321 = vmatprep.subr.bf16.mxu0 0
    %322 = vmatpush2.bf16.xpose.msra.mxu0 0
    %323 = vmatprep.subr.bf16.mxu0 0
    %324 = vmatpush2.bf16.xpose.msra.mxu0 0
    %325 = vmatprep.subr.bf16.mxu0 0
    %326 = vmatpush2.bf16.xpose.msra.mxu0 0
    %327 = vmatprep.subr.bf16.mxu0 0
    %328 = vmatpush2.bf16.xpose.msra.mxu0 0
    %329 = vmatprep.subr.bf16.mxu0 0
    %330 = vmatpush2.bf16.xpose.msra.mxu0 0
    %331 = vmatprep.subr.bf16.mxu0 0
    %332 = vmatpush2.bf16.xpose.msra.mxu0 0
    %333 = vmatprep.subr.bf16.mxu0 0
    %334 = vmatpush2.bf16.xpose.msra.mxu0 0
    %335 = vmatprep.mubr.bf16.mxu0 %v127
    %336 = vmatmul.mubr.bf16.gmra.mxu0 %v126
    %v337 = vpop.f32.mrf.mxu0
    %v338 = vadd.f32 %v166, %v337
    %v339 = vpop.f32.mrf.mxu0
    %v340 = vpop.f32.mrf.mxu0
    %v341 = vpop.f32.mrf.mxu0
    %342 = vdwg.mxu0
    %343 = vmatprep.subr.bf16.mxu0 0
    %344 = vmatpush1.bf16.xpose.msra.mxu0 0
    %345 = vmatprep.subr.bf16.mxu0 0
    %346 = vmatpush1.bf16.xpose.msra.mxu0 0
    %347 = vmatprep.subr.bf16.mxu0 0
    %348 = vmatpush1.bf16.xpose.msra.mxu0 0
    %349 = vmatprep.subr.bf16.mxu0 0
    %350 = vmatpush1.bf16.xpose.msra.mxu0 0
    %351 = vmatprep.subr.bf16.mxu0 0
    %352 = vmatpush1.bf16.xpose.msra.mxu0 0
    %353 = vmatprep.subr.bf16.mxu0 0
    %354 = vmatpush1.bf16.xpose.msra.mxu0 0
    %355 = vmatprep.subr.bf16.mxu0 %v258
    %356 = vmatpush1.bf16.xpose.msra.mxu0 %v257
    %357 = vmatprep.subr.bf16.mxu0 %v242
    %358 = vmatpush1.bf16.xpose.msra.mxu0 %v241
    %359 = vmatprep.subr.bf16.mxu0 0
    %360 = vmatpush2.bf16.xpose.msra.mxu0 0
    %361 = vmatprep.subr.bf16.mxu0 0
    %362 = vmatpush2.bf16.xpose.msra.mxu0 0
    %363 = vmatprep.subr.bf16.mxu0 0
    %364 = vmatpush2.bf16.xpose.msra.mxu0 0
    %365 = vmatprep.subr.bf16.mxu0 0
    %366 = vmatpush2.bf16.xpose.msra.mxu0 0
    %367 = vmatprep.subr.bf16.mxu0 0
    %368 = vmatpush2.bf16.xpose.msra.mxu0 0
    %369 = vmatprep.subr.bf16.mxu0 0
    %370 = vmatpush2.bf16.xpose.msra.mxu0 0
    %371 = vmatprep.subr.bf16.mxu0 0
    %372 = vmatpush2.bf16.xpose.msra.mxu0 0
    %373 = vmatprep.subr.bf16.mxu0 0
    %374 = vmatpush2.bf16.xpose.msra.mxu0 0
    %375 = vmatprep.mubr.bf16.mxu0 %v129
    %376 = vmatmul.mubr.bf16.gmra.mxu0 %v128
    %v377 = vpop.f32.mrf.mxu0
    %v378 = vadd.f32 %v338, %v377
    %v379 = vpop.f32.mrf.mxu0
    %v380 = vpop.f32.mrf.mxu0
    %v381 = vpop.f32.mrf.mxu0
    %382 = vdwg.mxu0
    %383 = vmatprep.subr.bf16.mxu0 0
    %384 = vmatpush1.bf16.xpose.msra.mxu0 0
    %385 = vmatprep.subr.bf16.mxu0 0
    %386 = vmatpush1.bf16.xpose.msra.mxu0 0
    %387 = vmatprep.subr.bf16.mxu0 0
    %388 = vmatpush1.bf16.xpose.msra.mxu0 0
    %389 = vmatprep.subr.bf16.mxu0 0
    %390 = vmatpush1.bf16.xpose.msra.mxu0 0
    %391 = vmatprep.subr.bf16.mxu0 0
    %392 = vmatpush1.bf16.xpose.msra.mxu0 0
    %393 = vmatprep.subr.bf16.mxu0 0
    %394 = vmatpush1.bf16.xpose.msra.mxu0 0
    %395 = vmatprep.subr.bf16.mxu0 %v260
    %396 = vmatpush1.bf16.xpose.msra.mxu0 %v259
    %397 = vmatprep.subr.bf16.mxu0 %v244
    %398 = vmatpush1.bf16.xpose.msra.mxu0 %v243
    %399 = vmatprep.subr.bf16.mxu0 0
    %400 = vmatpush2.bf16.xpose.msra.mxu0 0
    %401 = vmatprep.subr.bf16.mxu0 0
    %402 = vmatpush2.bf16.xpose.msra.mxu0 0
    %403 = vmatprep.subr.bf16.mxu0 0
    %404 = vmatpush2.bf16.xpose.msra.mxu0 0
    %405 = vmatprep.subr.bf16.mxu0 0
    %406 = vmatpush2.bf16.xpose.msra.mxu0 0
    %407 = vmatprep.subr.bf16.mxu0 0
    %408 = vmatpush2.bf16.xpose.msra.mxu0 0
    %409 = vmatprep.subr.bf16.mxu0 0
    %410 = vmatpush2.bf16.xpose.msra.mxu0 0
    %411 = vmatprep.subr.bf16.mxu0 0
    %412 = vmatpush2.bf16.xpose.msra.mxu0 0
    %413 = vmatprep.subr.bf16.mxu0 0
    %414 = vmatpush2.bf16.xpose.msra.mxu0 0
    %415 = vmatprep.mubr.bf16.mxu0 %v131
    %416 = vmatmul.mubr.bf16.gmra.mxu0 %v130
    %v417 = vpop.f32.mrf.mxu0
    %v418 = vadd.f32 %v378, %v417
    %v419 = vpop.f32.mrf.mxu0
    %v420 = vpop.f32.mrf.mxu0
    %v421 = vpop.f32.mrf.mxu0
    %422 = vdwg.mxu0
    %423 = vmatprep.subr.bf16.mxu0 0
    %424 = vmatpush1.bf16.xpose.msra.mxu0 0
    %425 = vmatprep.subr.bf16.mxu0 0
    %426 = vmatpush1.bf16.xpose.msra.mxu0 0
    %427 = vmatprep.subr.bf16.mxu0 0
    %428 = vmatpush1.bf16.xpose.msra.mxu0 0
    %429 = vmatprep.subr.bf16.mxu0 0
    %430 = vmatpush1.bf16.xpose.msra.mxu0 0
    %431 = vmatprep.subr.bf16.mxu0 0
    %432 = vmatpush1.bf16.xpose.msra.mxu0 0
    %433 = vmatprep.subr.bf16.mxu0 0
    %434 = vmatpush1.bf16.xpose.msra.mxu0 0
    %435 = vmatprep.subr.bf16.mxu0 %v262
    %436 = vmatpush1.bf16.xpose.msra.mxu0 %v261
    %437 = vmatprep.subr.bf16.mxu0 %v246
    %438 = vmatpush1.bf16.xpose.msra.mxu0 %v245
    %439 = vmatprep.subr.bf16.mxu0 0
    %440 = vmatpush2.bf16.xpose.msra.mxu0 0
    %441 = vmatprep.subr.bf16.mxu0 0
    %442 = vmatpush2.bf16.xpose.msra.mxu0 0
    %443 = vmatprep.subr.bf16.mxu0 0
    %444 = vmatpush2.bf16.xpose.msra.mxu0 0
    %445 = vmatprep.subr.bf16.mxu0 0
    %446 = vmatpush2.bf16.xpose.msra.mxu0 0
    %447 = vmatprep.subr.bf16.mxu0 0
    %448 = vmatpush2.bf16.xpose.msra.mxu0 0
    %449 = vmatprep.subr.bf16.mxu0 0
    %450 = vmatpush2.bf16.xpose.msra.mxu0 0
    %451 = vmatprep.subr.bf16.mxu0 0
    %452 = vmatpush2.bf16.xpose.msra.mxu0 0
    %453 = vmatprep.subr.bf16.mxu0 0
    %454 = vmatpush2.bf16.xpose.msra.mxu0 0
    %455 = vmatprep.mubr.bf16.mxu0 %v133
    %456 = vmatmul.mubr.bf16.gmra.mxu0 %v132
    %v457 = vpop.f32.mrf.mxu0
    %v458 = vadd.f32 %v418, %v457
    %v459 = vpop.f32.mrf.mxu0
    %v460 = vpop.f32.mrf.mxu0
    %v461 = vpop.f32.mrf.mxu0
    %462 = vdwg.mxu0
    %463 = vmatprep.subr.bf16.mxu0 0
    %464 = vmatpush1.bf16.xpose.msra.mxu0 0
    %465 = vmatprep.subr.bf16.mxu0 0
    %466 = vmatpush1.bf16.xpose.msra.mxu0 0
    %467 = vmatprep.subr.bf16.mxu0 0
    %468 = vmatpush1.bf16.xpose.msra.mxu0 0
    %469 = vmatprep.subr.bf16.mxu0 0
    %470 = vmatpush1.bf16.xpose.msra.mxu0 0
    %471 = vmatprep.subr.bf16.mxu0 0
    %472 = vmatpush1.bf16.xpose.msra.mxu0 0
    %473 = vmatprep.subr.bf16.mxu0 0
    %474 = vmatpush1.bf16.xpose.msra.mxu0 0
    %475 = vmatprep.subr.bf16.mxu0 %v264
    %476 = vmatpush1.bf16.xpose.msra.mxu0 %v263
    %477 = vmatprep.subr.bf16.mxu0 %v248
    %478 = vmatpush1.bf16.xpose.msra.mxu0 %v247
    %479 = vmatprep.subr.bf16.mxu0 0
    %480 = vmatpush2.bf16.xpose.msra.mxu0 0
    %481 = vmatprep.subr.bf16.mxu0 0
    %482 = vmatpush2.bf16.xpose.msra.mxu0 0
    %483 = vmatprep.subr.bf16.mxu0 0
    %484 = vmatpush2.bf16.xpose.msra.mxu0 0
    %485 = vmatprep.subr.bf16.mxu0 0
    %486 = vmatpush2.bf16.xpose.msra.mxu0 0
    %487 = vmatprep.subr.bf16.mxu0 0
    %488 = vmatpush2.bf16.xpose.msra.mxu0 0
    %489 = vmatprep.subr.bf16.mxu0 0
    %490 = vmatpush2.bf16.xpose.msra.mxu0 0
    %491 = vmatprep.subr.bf16.mxu0 0
    %492 = vmatpush2.bf16.xpose.msra.mxu0 0
    %493 = vmatprep.subr.bf16.mxu0 0
    %494 = vmatpush2.bf16.xpose.msra.mxu0 0
    %495 = vmatprep.mubr.bf16.mxu0 %v135
    %496 = vmatmul.mubr.bf16.gmra.mxu0 %v134
    %v497 = vpop.f32.mrf.mxu0
    %v498 = vadd.f32 %v458, %v497
    %v499 = vpop.f32.mrf.mxu0
    %v500 = vpop.f32.mrf.mxu0
    %v501 = vpop.f32.mrf.mxu0
    %502 = vdwg.mxu0
    %503 = vmatprep.subr.bf16.mxu0 0
    %504 = vmatpush1.bf16.xpose.msra.mxu0 0
    %505 = vmatprep.subr.bf16.mxu0 0
    %506 = vmatpush1.bf16.xpose.msra.mxu0 0
    %507 = vmatprep.subr.bf16.mxu0 0
    %508 = vmatpush1.bf16.xpose.msra.mxu0 0
    %509 = vmatprep.subr.bf16.mxu0 0
    %510 = vmatpush1.bf16.xpose.msra.mxu0 0
    %511 = vmatprep.subr.bf16.mxu0 0
    %512 = vmatpush1.bf16.xpose.msra.mxu0 0
    %513 = vmatprep.subr.bf16.mxu0 0
    %514 = vmatpush1.bf16.xpose.msra.mxu0 0
    %515 = vmatprep.subr.bf16.mxu0 %v266
    %516 = vmatpush1.bf16.xpose.msra.mxu0 %v265
    %517 = vmatprep.subr.bf16.mxu0 %v250
    %518 = vmatpush1.bf16.xpose.msra.mxu0 %v249
    %519 = vmatprep.subr.bf16.mxu0 0
    %520 = vmatpush2.bf16.xpose.msra.mxu0 0
    %521 = vmatprep.subr.bf16.mxu0 0
    %522 = vmatpush2.bf16.xpose.msra.mxu0 0
    %523 = vmatprep.subr.bf16.mxu0 0
    %524 = vmatpush2.bf16.xpose.msra.mxu0 0
    %525 = vmatprep.subr.bf16.mxu0 0
    %526 = vmatpush2.bf16.xpose.msra.mxu0 0
    %527 = vmatprep.subr.bf16.mxu0 0
    %528 = vmatpush2.bf16.xpose.msra.mxu0 0
    %529 = vmatprep.subr.bf16.mxu0 0
    %530 = vmatpush2.bf16.xpose.msra.mxu0 0
    %531 = vmatprep.subr.bf16.mxu0 0
    %532 = vmatpush2.bf16.xpose.msra.mxu0 0
    %533 = vmatprep.subr.bf16.mxu0 0
    %534 = vmatpush2.bf16.xpose.msra.mxu0 0
    %535 = vmatprep.mubr.bf16.mxu0 %v137
    %536 = vmatmul.mubr.bf16.gmra.mxu0 %v136
    %v537 = vpop.f32.mrf.mxu0
    %v538 = vadd.f32 %v498, %v537
    %v539 = vpop.f32.mrf.mxu0
    %v540 = vpop.f32.mrf.mxu0
    %v541 = vpop.f32.mrf.mxu0
    %542 = vdwg.mxu0
    %543 = vmatprep.subr.bf16.mxu0 0
    %544 = vmatpush1.bf16.xpose.msra.mxu0 0
    %545 = vmatprep.subr.bf16.mxu0 0
    %546 = vmatpush1.bf16.xpose.msra.mxu0 0
    %547 = vmatprep.subr.bf16.mxu0 0
    %548 = vmatpush1.bf16.xpose.msra.mxu0 0
    %549 = vmatprep.subr.bf16.mxu0 0
    %550 = vmatpush1.bf16.xpose.msra.mxu0 0
    %551 = vmatprep.subr.bf16.mxu0 0
    %552 = vmatpush1.bf16.xpose.msra.mxu0 0
    %553 = vmatprep.subr.bf16.mxu0 0
    %554 = vmatpush1.bf16.xpose.msra.mxu0 0
    %555 = vmatprep.subr.bf16.mxu0 %v268
    %556 = vmatpush1.bf16.xpose.msra.mxu0 %v267
    %557 = vmatprep.subr.bf16.mxu0 %v252
    %558 = vmatpush1.bf16.xpose.msra.mxu0 %v251
    %559 = vmatprep.subr.bf16.mxu0 0
    %560 = vmatpush2.bf16.xpose.msra.mxu0 0
    %561 = vmatprep.subr.bf16.mxu0 0
    %562 = vmatpush2.bf16.xpose.msra.mxu0 0
    %563 = vmatprep.subr.bf16.mxu0 0
    %564 = vmatpush2.bf16.xpose.msra.mxu0 0
    %565 = vmatprep.subr.bf16.mxu0 0
    %566 = vmatpush2.bf16.xpose.msra.mxu0 0
    %567 = vmatprep.subr.bf16.mxu0 0
    %568 = vmatpush2.bf16.xpose.msra.mxu0 0
    %569 = vmatprep.subr.bf16.mxu0 0
    %570 = vmatpush2.bf16.xpose.msra.mxu0 0
    %571 = vmatprep.subr.bf16.mxu0 0
    %572 = vmatpush2.bf16.xpose.msra.mxu0 0
    %573 = vmatprep.subr.bf16.mxu0 0
    %574 = vmatpush2.bf16.xpose.msra.mxu0 0
    %575 = vmatprep.mubr.bf16.mxu0 %v139
    %576 = vmatmul.mubr.bf16.gmra.mxu0 %v138
    %v577 = vpop.f32.mrf.mxu0
    %v578 = vadd.f32 %v538, %v577
    %v579 = vpop.f32.mrf.mxu0
    %v580 = vpop.f32.mrf.mxu0
    %v581 = vpop.f32.mrf.mxu0
    %582 = vdwg.mxu0
    %583 = vmatprep.subr.bf16.mxu0 0
    %584 = vmatpush1.bf16.xpose.msra.mxu0 0
    %585 = vmatprep.subr.bf16.mxu0 0
    %586 = vmatpush1.bf16.xpose.msra.mxu0 0
    %587 = vmatprep.subr.bf16.mxu0 0
    %588 = vmatpush1.bf16.xpose.msra.mxu0 0
    %589 = vmatprep.subr.bf16.mxu0 0
    %590 = vmatpush1.bf16.xpose.msra.mxu0 0
    %591 = vmatprep.subr.bf16.mxu0 0
    %592 = vmatpush1.bf16.xpose.msra.mxu0 0
    %593 = vmatprep.subr.bf16.mxu0 0
    %594 = vmatpush1.bf16.xpose.msra.mxu0 0
    %595 = vmatprep.subr.bf16.mxu0 %v270
    %596 = vmatpush1.bf16.xpose.msra.mxu0 %v269
    %597 = vmatprep.subr.bf16.mxu0 %v254
    %598 = vmatpush1.bf16.xpose.msra.mxu0 %v253
    %599 = vmatprep.subr.bf16.mxu0 0
    %600 = vmatpush2.bf16.xpose.msra.mxu0 0
    %601 = vmatprep.subr.bf16.mxu0 0
    %602 = vmatpush2.bf16.xpose.msra.mxu0 0
    %603 = vmatprep.subr.bf16.mxu0 0
    %604 = vmatpush2.bf16.xpose.msra.mxu0 0
    %605 = vmatprep.subr.bf16.mxu0 0
    %606 = vmatpush2.bf16.xpose.msra.mxu0 0
    %607 = vmatprep.subr.bf16.mxu0 0
    %608 = vmatpush2.bf16.xpose.msra.mxu0 0
    %609 = vmatprep.subr.bf16.mxu0 0
    %610 = vmatpush2.bf16.xpose.msra.mxu0 0
    %611 = vmatprep.subr.bf16.mxu0 0
    %612 = vmatpush2.bf16.xpose.msra.mxu0 0
    %613 = vmatprep.subr.bf16.mxu0 0
    %614 = vmatpush2.bf16.xpose.msra.mxu0 0
    %615 = vmatprep.mubr.bf16.mxu0 %v141
    %616 = vmatmul.mubr.bf16.gmra.mxu0 %v140
    %v617 = vpop.f32.mrf.mxu0
    %v618 = vadd.f32 %v578, %v617
    %v619 = vpop.f32.mrf.mxu0
    %v620 = vpop.f32.mrf.mxu0
    %v621 = vpop.f32.mrf.mxu0
    %622 = vdwg.mxu0
    %v623 = vlaneseq
    %v624 = vand.u32 %v623, 127
    %vm625 = vcmp.lt.s32.totalorder %v624, 4
    %v626 = vsel %vm625, %v618, -inf
    %vm627 = vcmask 131072
    %v628 = vsel %vm627, %v626, -inf
    %629 = vmax.xlane.f32.xlu0 %v628
    %v630 = vpop.xlane.xlu0 %629
    %v631 = vsub.f32 %v626, %v630
    %v632 = vmul.f32 %v631, 1.442695
    %v633 = vpow.pop %v632
    %v634 = vsel %vm625, %v633, 0.0
    %v635 = vsel %vm627, %v634, 0.0
    %636 = vadd.xlane.f32.xlu0 %v635
    %v637 = vpop.xlane.xlu0 %636
    %v638 = vrcp.pop %v637
    %v639 = vmul.f32 %v634, %v638
    %v640 = vsel %vm625, %v639, %v618
    %641 = vst.msk [vmem:[#allocation7] sm:$0x1] %vm627, %v640
    // Predicated region
    $region22: #{tpu_custom_call.1} parent=1 // pred_check
      _
    $region23: #{tpu_custom_call.1} parent=1 // pred_check_branch
      %643 = sbr.rel (0) target = $region25
    $region24: #{tpu_custom_call.1} parent=1 // pred_region
      %s645 = ssub.s32 16, 16
      %646 = vsyncadd [#allocation4], %s645
      %s648 = sshll.u32 [#allocation7], 4
      %s649 = int_to_ptr.vmem [resolvable:$true] %s648
      %651 = dma.vmem_to_hbm [thread:$0]  %s649, 16, %s3, [#allocation4]
    $region25: #{tpu_custom_call.1} parent=1 // pred_fallthru
      _
    // Predicated region
    $region26: #{tpu_custom_call.1} parent=1 // pred_check
      _
    $region27: #{tpu_custom_call.1} parent=1 // pred_check_branch
      %653 = sbr.rel (0) target = $region29
    $region28: #{tpu_custom_call.1} parent=1 // pred_region
      %654 = dma.done [#allocation4], 16
    $region29: #{tpu_custom_call.1} parent=1 // pred_fallthru
      _
    %655 = vsyncpa [#allocation3], 1
    %656 = vsyncpa [#allocation6], 1
    %657 = vsyncpa [#allocation4], 1

</llo_original>
